<compile_context>
chip_gen: v5e
topology: v5e:2x2
jax: 0.10.0
libtpu: 0.0.40
codegen_flags: <defaults>
</compile_context>

<pallas_src>
import functools

import jax
import jax.numpy as jnp
from jax import lax
from jax.experimental import pallas as pl
from jax.experimental.pallas import tpu as pltpu


_LANE = 128
_MAX_TILE_ROWS = 2048           # (2048,128) f32 = 1 MiB per stream per grid step
_LOGIT_PAD = -1.0e4             # exp(-|x|)=0, sigmoid=0, bce=0 -> zero contribution
_KL_PALLAS_MIN_ELEMS = 1 << 15  # below this a kernel dispatch costs more than the KL
_VMEM_LIMIT_BYTES = 32 * 1024 * 1024
_DEFAULT_TC_GUESS = 2           # v7x has 2 TensorCores; elsewhere it is a serial loop


def _round_up(x, m):
    return -(-x // m) * m


def _num_parallel_chunks(nblocks):
    """Size of the outer 'parallel' grid axis (<= TensorCore count, <= nblocks)."""
    if nblocks < 2:
        return 1
    n = _DEFAULT_TC_GUESS
    try:
        info = pltpu.get_tpu_info()
        for attr in ("num_cores", "core_count", "num_tensorcores", "tensorcore_count"):
            v = getattr(info, attr, None)
            if v:
                n = int(v)
                break
    except Exception:  # defensive: fall back to the static guess
        pass
    return max(1, min(n, nblocks))


def _plan(total_elems):
    """Tiling plan for a flat (rows, 128) reduction.

    Pads only to the next 128-element boundary (and the caller only materializes the
    pad when it is actually needed).  Rows are never rounded up to a tile multiple:
    the ragged tail / phantom blocks are masked inside the kernel instead.
    """
    padded = _round_up(total_elems, _LANE)
    rows = padded // _LANE
    tile = rows if rows <= _MAX_TILE_ROWS else _MAX_TILE_ROWS
    nblocks = pl.cdiv(rows, tile)
    n_par = _num_parallel_chunks(nblocks)
    inner = pl.cdiv(nblocks, n_par)
    need_mask = (n_par * inner * tile) != rows
    return padded, rows, tile, nblocks, n_par, inner, need_mask


def _as_rows(x, padded_total, pad_value):
    """Flatten row-major and view as (rows, 128).

    The reshape of a contiguous array is free; jnp.pad (a full copy) only triggers
    when the element count is not a multiple of 128, and the pad value is chosen so
    padded elements contribute exactly zero to every reduction.
    """
    # TODO(synk): when the pad copy is unavoidable anyway, fuse a bf16 downcast of
    # the binary targets into it to cut kernel read bytes further.
    flat = x.reshape(-1)
    pad = padded_total - flat.shape[0]
    if pad:
        flat = jnp.pad(flat, (0, pad), constant_values=pad_value)
    return flat.reshape(padded_total // _LANE, _LANE)


def _block_index_map(inner, nblocks):
    """Row-block index for grid point (p, k), clamped so partial/phantom iterations
    never request a block start past the array (their contributions are masked)."""
    last = nblocks - 1

    def idx(p, k):
        return (jnp.minimum(p * inner + k, last), 0)

    return idx


def _compiler_params():
    # TODO(synk): try pltpu.CORE_PARALLEL / pl.core_map for the leading axis on v7x
    # and confirm with a profile that both TensorCores stream their own HBM chunk.
    return pltpu.CompilerParams(
        dimension_semantics=("parallel", "arbitrary"),
        vmem_limit_bytes=_VMEM_LIMIT_BYTES,
    )


def _row_mask(tile, inner, valid_rows):
    """(tile, 1) bool mask of rows that lie inside the real array."""
    b = pl.program_id(0) * inner + pl.program_id(1)      # un-clamped block index
    rid = b * tile + lax.broadcasted_iota(jnp.int32, (tile, 1), 0)
    return rid < valid_rows


# ----------------------------------------------------------------------------
# Kernel 1: BCE-with-logits (+ optional weights) and |targets - sigmoid(logits)|.
# Grid = (parallel_chunks, inner_steps); each chunk accumulates lane partials into
# its resident (1, 1, 128) output block, zero-initialized on the first inner step.
# ----------------------------------------------------------------------------
def _bce_rec_body(inp_ref, logit_ref, w_ref, nll_out, rec_out, *,
                  valid_rows, tile, inner, need_mask):
    k = pl.program_id(1)

    @pl.when(k == 0)
    def _():
        nll_out[...] = jnp.zeros_like(nll_out)
        rec_out[...] = jnp.zeros_like(rec_out)

    x = logit_ref[...].astype(jnp.float32)     # logits
    z = inp_ref[...].astype(jnp.float32)       # targets ("inputs" in the torch code)

    e = jnp.exp(-jnp.abs(x))                   # reused for softplus AND sigmoid
    # BCEWithLogitsLoss(reduction='none'): max(x, 0) - x*z + log(1 + exp(-|x|))
    nll = jnp.maximum(x, 0.0) - x * z + jnp.log1p(e)
    inv = pl.reciprocal(1.0 + e, approx=True)
    sig = jnp.where(x >= 0.0, inv, e * inv)    # sigmoid(x) rebuilt from e (one EUP op)
    rec = jnp.abs(z - sig)

    if w_ref is not None:                      # (tile,128) full or (tile,1) per-row
        nll = nll * w_ref[...].astype(jnp.float32)

    if need_mask:                              # ragged tail / phantom blocks
        live = _row_mask(tile, inner, valid_rows)
        nll = jnp.where(live, nll, 0.0)
        rec = jnp.where(live, rec, 0.0)

    # Fold the tile to a lane-dense (1, 128) partial and accumulate into the
    # resident output block (revisited across the 'arbitrary' k axis).
    nll_out[...] += jnp.sum(nll, axis=0, keepdims=True)[None]
    rec_out[...] += jnp.sum(rec, axis=0, keepdims=True)[None]


def _bce_rec_kernel(inp_ref, logit_ref, nll_out, rec_out, **statics):
    _bce_rec_body(inp_ref, logit_ref, None, nll_out, rec_out, **statics)


def _bce_rec_weighted_kernel(inp_ref, logit_ref, w_ref, nll_out, rec_out, **statics):
    _bce_rec_body(inp_ref, logit_ref, w_ref, nll_out, rec_out, **statics)


# ----------------------------------------------------------------------------
# Kernel 2: KL of a diagonal Gaussian vs N(0, I): 0.5 * sum(mu^2 + exp(lv) - 1 - lv)
# ----------------------------------------------------------------------------
def _kl_kernel(mean_ref, logvar_ref, kl_out, *, valid_rows, tile, inner, need_mask):
    k = pl.program_id(1)

    @pl.when(k == 0)
    def _():
        kl_out[...] = jnp.zeros_like(kl_out)

    mu = mean_ref[...].astype(jnp.float32)
    lv = logvar_ref[...].astype(jnp.float32)
    kl = 0.5 * (mu * mu + jnp.exp(lv) - 1.0 - lv)

    if need_mask:
        kl = jnp.where(_row_mask(tile, inner, valid_rows), kl, 0.0)

    kl_out[...] += jnp.sum(kl, axis=0, keepdims=True)[None]


# ----------------------------------------------------------------------------
# Wrappers
# ----------------------------------------------------------------------------
def _reduce_bce_rec(inputs, logits, w_full=None, w_per_row=None):
    """Returns (sum of (weighted) BCE-with-logits, sum of |targets - sigmoid|)."""
    total = inputs.size
    padded, rows, tile, nblocks, n_par, inner, need_mask = _plan(total)

    in2d = _as_rows(inputs, padded, 0.0)
    lg2d = _as_rows(logits, padded, _LOGIT_PAD)

    idx = _block_index_map(inner, nblocks)
    data_spec = pl.BlockSpec((tile, _LANE), idx)
    out_spec = pl.BlockSpec((1, 1, _LANE), lambda p, k: (p, 0, 0))
    out_shape = (jax.ShapeDtypeStruct((n_par, 1, _LANE), jnp.float32),
                 jax.ShapeDtypeStruct((n_par, 1, _LANE), jnp.float32))
    statics = dict(valid_rows=rows, tile=tile, inner=inner, need_mask=need_mask)

    operands = [in2d, lg2d]
    in_specs = [data_spec, data_spec]
    if w_full is not None:
        operands.append(_as_rows(w_full, padded, 0.0))
        in_specs.append(data_spec)
        kernel = functools.partial(_bce_rec_weighted_kernel, **statics)
    elif w_per_row is not None:
        # One weight per 128-lane row: ~1/128 of a full stream, broadcast on the VPU.
        operands.append(w_per_row.reshape(rows, 1))
        in_specs.append(pl.BlockSpec((tile, 1), idx))
        kernel = functools.partial(_bce_rec_weighted_kernel, **statics)
    else:
        kernel = functools.partial(_bce_rec_kernel, **statics)

    nll_p, rec_p = pl.pallas_call(
        kernel,
        out_shape=out_shape,
        grid_spec=pltpu.PrefetchScalarGridSpec(
            num_scalar_prefetch=0,
            grid=(n_par, inner),
            in_specs=in_specs,
            out_specs=[out_spec, out_spec]),
        compiler_params=_compiler_params(),
    )(*operands)
    return jnp.sum(nll_p), jnp.sum(rec_p)


def _reduce_kl(mean, logvar):
    total = mean.size
    padded, rows, tile, nblocks, n_par, inner, need_mask = _plan(total)

    mu2d = _as_rows(mean, padded, 0.0)
    lv2d = _as_rows(logvar, padded, 0.0)

    idx = _block_index_map(inner, nblocks)
    data_spec = pl.BlockSpec((tile, _LANE), idx)
    out_spec = pl.BlockSpec((1, 1, _LANE), lambda p, k: (p, 0, 0))
    kernel = functools.partial(_kl_kernel, valid_rows=rows, tile=tile,
                               inner=inner, need_mask=need_mask)

    kl_p = pl.pallas_call(
        kernel,
        out_shape=jax.ShapeDtypeStruct((n_par, 1, _LANE), jnp.float32),
        grid_spec=pltpu.PrefetchScalarGridSpec(
            num_scalar_prefetch=0,
            grid=(n_par, inner),
            in_specs=[data_spec, data_spec],
            out_specs=out_spec),
        compiler_params=_compiler_params(),
    )(mu2d, lv2d)
    return jnp.sum(kl_p)


def _per_row_weights(w, shape):
    """Compress a broadcastable weight to one value per 128-lane row, or None.

    Succeeds when the trailing input axes on which `w` is singleton span a multiple
    of 128 contiguous (row-major) elements -- e.g. (1,C,1,1) channel weights on NCHW
    inputs with H*W % 128 == 0.  The result streams ~1/128 of a full weight array.
    """
    nd = len(shape)
    if w.ndim > nd:
        return None
    ws = (1,) * (nd - w.ndim) + tuple(w.shape)
    for d in range(nd):
        if ws[d] not in (1, shape[d]):
            return None
    trailing = 1
    d = nd - 1
    while d >= 0 and ws[d] == 1:
        trailing *= shape[d]
        d -= 1
    if trailing % _LANE != 0:
        return None
    lead_shape = tuple(shape[:d + 1])
    w_lead = jnp.broadcast_to(w.reshape(ws[:d + 1]), lead_shape).reshape(-1)
    return jnp.repeat(w_lead, trailing // _LANE).astype(jnp.float32)


class DiagonalGaussianPosterior:
    """Minimal stand-in for ldm's DiagonalGaussianDistribution (mean / logvar only)."""

    def __init__(self, mean, logvar):
        self.mean = mean
        self.logvar = logvar

    def kl(self):
        """Per-sample KL against N(0, I) (plain jnp convenience)."""
        m = self.mean.astype(jnp.float32)
        lv = self.logvar.astype(jnp.float32)
        axes = tuple(range(1, m.ndim))
        return 0.5 * jnp.sum(m * m + jnp.exp(lv) - 1.0 - lv, axis=axes)


class BernoulliLoss:
    """Pallas/JAX port of the PyTorch BernoulliLoss module (forward pass)."""

    def __init__(self, kl_weight=1.0):
        self.kl_weight = float(kl_weight)

    def __call__(self, inputs, logits, posteriors, weights=None, split="train"):
        batch = inputs.shape[0]
        n_elems = inputs.size

        # Weight handling: scalar weights fold analytically (no HBM stream); small
        # broadcastable weights are compressed to per-row values; only a genuinely
        # full-shape weight tensor is streamed at full size.
        w_scalar = None
        w_full = None
        w_per_row = None
        if weights is not None:
            w = jnp.asarray(weights)
            if w.size == 1:
                w_scalar = w.reshape(()).astype(jnp.float32)
            elif tuple(w.shape) == tuple(inputs.shape):
                w_full = w
            else:
                w_per_row = _per_row_weights(w, tuple(inputs.shape))
                if w_per_row is None:
                    # TODO(synk): per-row compression needs the trailing broadcast
                    # extent to be a multiple of 128; fall back to a full stream.
                    w_full = jnp.broadcast_to(w, inputs.shape)

        nll_sum, rec_sum = _reduce_bce_rec(inputs, logits, w_full=w_full,
                                           w_per_row=w_per_row)
        if w_scalar is not None:
            nll_sum = nll_sum * w_scalar

        mean, logvar = posteriors.mean, posteriors.logvar
        if mean.size >= _KL_PALLAS_MIN_ELEMS:
            kl_sum = _reduce_kl(mean, logvar)
        else:
            # A second kernel dispatch costs more than a few-KB reduction in XLA.
            m = mean.astype(jnp.float32)
            lv = logvar.astype(jnp.float32)
            kl_sum = 0.5 * jnp.sum(m * m + jnp.exp(lv) - 1.0 - lv)

        nll_loss = nll_sum / batch             # torch.sum(nll) / nll.shape[0]
        kl_loss = kl_sum / batch               # torch.sum(kl)  / kl.shape[0]
        loss = nll_loss + self.kl_weight * kl_loss
        rec_mean = rec_sum / n_elems           # rec_loss.mean()

        log = {
            f"{split}/total_loss": loss,
            f"{split}/kl_loss": kl_loss,
            f"{split}/nll_loss": nll_loss,
            f"{split}/rec_loss": rec_mean,
        }
        return loss, log


if __name__ == "__main__":
    key = jax.random.PRNGKey(0)
    ks = jax.random.split(key, 12)

    def jnp_ref(inputs, logits, mean, logvar, weights=None):
        x = logits.astype(jnp.float32)
        z = inputs.astype(jnp.float32)
        nll = jnp.maximum(x, 0.0) - x * z + jnp.log1p(jnp.exp(-jnp.abs(x)))
        rec = jnp.abs(z - jax.nn.sigmoid(x))
        if weights is not None:
            nll = jnp.broadcast_to(jnp.asarray(weights, jnp.float32), nll.shape) * nll
        nll_loss = jnp.sum(nll) / inputs.shape[0]
        kl = 0.5 * jnp.sum(mean.astype(jnp.float32) ** 2
                           + jnp.exp(logvar.astype(jnp.float32))
                           - 1.0 - logvar.astype(jnp.float32))
        kl_loss = kl / inputs.shape[0]
        return nll_loss + kl_loss, nll_loss, kl_loss, jnp.mean(rec)

    def check(loss, log, ref, split="train"):
        total_ref, nll_ref, kl_ref, rec_ref = ref
        assert jnp.allclose(loss, total_ref, rtol=1e-4, atol=1e-3)
        assert jnp.allclose(log[f"{split}/nll_loss"], nll_ref, rtol=1e-4, atol=1e-3)
        assert jnp.allclose(log[f"{split}/kl_loss"], kl_ref, rtol=1e-4, atol=1e-3)
        # rec uses the EUP-approx reciprocal -> slightly looser tolerance.
        assert jnp.allclose(log[f"{split}/rec_loss"], rec_ref, rtol=2e-3, atol=2e-3)

    loss_mod = BernoulliLoss(kl_weight=1.0)

    # NCHW shapes: inputs/logits (B=2, C=4, H=16, W=16); latent (2, 4, 8, 8).
    inputs = (jax.random.uniform(ks[0], (2, 4, 16, 16)) > 0.5).astype(jnp.float32)
    logits = jax.random.normal(ks[1], (2, 4, 16, 16), dtype=jnp.float32)
    post = DiagonalGaussianPosterior(
        mean=jax.random.normal(ks[2], (2, 4, 8, 8), dtype=jnp.float32),
        logvar=0.1 * jax.random.normal(ks[3], (2, 4, 8, 8), dtype=jnp.float32))

    # 1) Unweighted path.
    loss, log = loss_mod(inputs, logits, post)
    jax.block_until_ready(loss)
    check(loss, log, jnp_ref(inputs, logits, post.mean, post.logvar))

    # 2) Scalar weight (folded in the wrapper; reuses the unweighted kernel).
    loss_s, log_s = loss_mod(inputs, logits, post, weights=0.7)
    check(loss_s, log_s, jnp_ref(inputs, logits, post.mean, post.logvar, weights=0.7))

    # 3) Per-channel (1,C,1,1) weights -> compact per-row weight stream.
    w_c = 0.5 + jax.random.uniform(ks[4], (1, 4, 1, 1), dtype=jnp.float32)
    loss_c, log_c = loss_mod(inputs, logits, post, weights=w_c)
    check(loss_c, log_c, jnp_ref(inputs, logits, post.mean, post.logvar, weights=w_c))

    # 4) Full-shape per-element weights -> streamed weight tiles.
    w_f = 0.5 + jax.random.uniform(ks[5], (2, 4, 16, 16), dtype=jnp.float32)
    loss_f, log_f = loss_mod(inputs, logits, post, weights=w_f)
    check(loss_f, log_f, jnp_ref(inputs, logits, post.mean, post.logvar, weights=w_f))

    # 5) Ragged element count (not a multiple of 128) -> minimal zero-contribution pad.
    in_r = (jax.random.uniform(ks[6], (2, 3, 7, 11)) > 0.5).astype(jnp.float32)
    lg_r = jax.random.normal(ks[7], (2, 3, 7, 11), dtype=jnp.float32)
    post_r = DiagonalGaussianPosterior(
        mean=jax.random.normal(ks[8], (2, 3, 4, 4), dtype=jnp.float32),
        logvar=0.1 * jax.random.normal(ks[9], (2, 3, 4, 4), dtype=jnp.float32))
    loss_r, log_r = loss_mod(in_r, lg_r, post_r)
    check(loss_r, log_r, jnp_ref(in_r, lg_r, post_r.mean, post_r.logvar))

    # 6) Multi-block grid with an in-kernel-masked tail (rows not a tile multiple).
    in_b = (jax.random.uniform(ks[10], (2, 4, 257, 128)) > 0.5).astype(jnp.float32)
    lg_b = jax.random.normal(ks[11], (2, 4, 257, 128), dtype=jnp.float32)
    nll_b, rec_b = _reduce_bce_rec(in_b, lg_b)
    nll_b_ref = jnp.sum(jnp.maximum(lg_b, 0.0) - lg_b * in_b
                        + jnp.log1p(jnp.exp(-jnp.abs(lg_b))))
    rec_b_ref = jnp.sum(jnp.abs(in_b - jax.nn.sigmoid(lg_b)))
    assert jnp.allclose(nll_b, nll_b_ref, rtol=1e-4, atol=1e-2)
    assert jnp.allclose(rec_b, rec_b_ref, rtol=2e-3, atol=1e-1)

    # 7) Pallas KL kernel path (large latent).
    mu_l = jax.random.normal(ks[2], (4, 4, 64, 64), dtype=jnp.float32)
    lv_l = 0.1 * jax.random.normal(ks[3], (4, 4, 64, 64), dtype=jnp.float32)
    kl_l = _reduce_kl(mu_l, lv_l)
    kl_l_ref = 0.5 * jnp.sum(mu_l ** 2 + jnp.exp(lv_l) - 1.0 - lv_l)
    assert jnp.allclose(kl_l, kl_l_ref, rtol=1e-4, atol=1e-2)

    jax.block_until_ready(loss_f)
    print("KERNEL_OK")
</pallas_src>

<mosaic_0001>
module attributes {stable_mosaic.version = 11 : i64} {
  func.func @_bce_rec_kernel(%arg0: i32, %arg1: i32, %arg2: memref<16x128xf32, #tpu.memory_space<vmem>>, %arg3: memref<16x128xf32, #tpu.memory_space<vmem>>, %arg4: memref<1x1x128xf32, #tpu.memory_space<vmem>>, %arg5: memref<1x1x128xf32, #tpu.memory_space<vmem>>) attributes {dimension_semantics = [#tpu.dimension_semantics<parallel>, #tpu.dimension_semantics<arbitrary>], iteration_bounds = array<i64: 1, 1>, scalar_prefetch = 0 : i64, scratch_operands = 0 : i64, tpu.core_type = #tpu.core_type<tc>, window_params = [{transform_indices = @transform_0, window_bounds = array<i64: 16, 128>}, {transform_indices = @transform_1, window_bounds = array<i64: 16, 128>}, {transform_indices = @transform_2, window_bounds = array<i64: 1, 1, 128>}, {transform_indices = @transform_3, window_bounds = array<i64: 1, 1, 128>}]} {
    %c0_i32 = arith.constant 0 : i32
    %0 = arith.cmpi eq, %arg1, %c0_i32 : i32
    %1 = arith.extui %0 : i1 to i32
    %c0_i32_0 = arith.constant 0 : i32
    %2 = arith.cmpi ne, %1, %c0_i32_0 : i32
    scf.if %2 {
      %cst_21 = arith.constant 0.000000e+00 : f32
      %36 = vector.broadcast %cst_21 : f32 to vector<1x1x128xf32>
      %c0_22 = arith.constant 0 : index
      %c0_23 = arith.constant 0 : index
      %c0_24 = arith.constant 0 : index
      %37 = vector.load %arg4[%c0_22, %c0_23, %c0_24] : memref<1x1x128xf32, #tpu.memory_space<vmem>>, vector<1x1x128xf32>
      tpu.vector_store %arg4[%c0_22, %c0_23, %c0_24], %36 {strides = array<i32>} : memref<1x1x128xf32, #tpu.memory_space<vmem>>, vector<1x1x128xf32>,
      %cst_25 = arith.constant 0.000000e+00 : f32
      %38 = vector.broadcast %cst_25 : f32 to vector<1x1x128xf32>
      %c0_26 = arith.constant 0 : index
      %c0_27 = arith.constant 0 : index
      %c0_28 = arith.constant 0 : index
      %39 = vector.load %arg5[%c0_26, %c0_27, %c0_28] : memref<1x1x128xf32, #tpu.memory_space<vmem>>, vector<1x1x128xf32>
      tpu.vector_store %arg5[%c0_26, %c0_27, %c0_28], %38 {strides = array<i32>} : memref<1x1x128xf32, #tpu.memory_space<vmem>>, vector<1x1x128xf32>,
    } else {
    }
    %c0 = arith.constant 0 : index
    %c0_1 = arith.constant 0 : index
    %3 = vector.load %arg3[%c0, %c0_1] : memref<16x128xf32, #tpu.memory_space<vmem>>, vector<16x128xf32>
    %c0_2 = arith.constant 0 : index
    %c0_3 = arith.constant 0 : index
    %4 = vector.load %arg2[%c0_2, %c0_3] : memref<16x128xf32, #tpu.memory_space<vmem>>, vector<16x128xf32>
    %5 = math.absf %3 : vector<16x128xf32>
    %cst = arith.constant 0.000000e+00 : f32
    %6 = vector.broadcast %cst : f32 to vector<16x128xf32>
    %7 = arith.subf %6, %5 : vector<16x128xf32>
    %8 = math.exp %7 : vector<16x128xf32>
    %cst_4 = arith.constant 0.000000e+00 : f32
    %9 = vector.broadcast %cst_4 : f32 to vector<16x128xf32>
    %10 = arith.maximumf %3, %9 : vector<16x128xf32>
    %11 = arith.mulf %3, %4 : vector<16x128xf32>
    %12 = arith.subf %10, %11 : vector<16x128xf32>
    %13 = math.log1p %8 : vector<16x128xf32>
    %14 = arith.addf %12, %13 : vector<16x128xf32>
    %cst_5 = arith.constant 1.000000e+00 : f32
    %15 = vector.broadcast %cst_5 : f32 to vector<16x128xf32>
    %16 = arith.addf %15, %8 : vector<16x128xf32>
    %17 = tpu.reciprocal %16 {approx = true} : vector<16x128xf32> -> vector<16x128xf32>
    %cst_6 = arith.constant 0.000000e+00 : f32
    %18 = vector.broadcast %cst_6 : f32 to vector<16x128xf32>
    %19 = arith.cmpf oge, %3, %18 : vector<16x128xf32>
    %20 = arith.mulf %8, %17 : vector<16x128xf32>
    %21 = arith.select %19, %17, %20 : vector<16x128xi1>, vector<16x128xf32>
    %22 = arith.subf %4, %21 : vector<16x128xf32>
    %23 = math.absf %22 : vector<16x128xf32>
    %c0_7 = arith.constant 0 : index
    %c0_8 = arith.constant 0 : index
    %c0_9 = arith.constant 0 : index
    %24 = vector.load %arg4[%c0_7, %c0_8, %c0_9] : memref<1x1x128xf32, #tpu.memory_space<vmem>>, vector<1x1x128xf32>
    %cst_10 = arith.constant dense<0.000000e+00> : vector<128xf32>
    %25 = vector.multi_reduction <add>, %14, %cst_10 [0] : vector<16x128xf32> to vector<128xf32>
    %26 = vector.shape_cast %25 : vector<128xf32> to vector<1x128xf32>
    %27 = vector.shape_cast %26 : vector<1x128xf32> to vector<1x1x128xf32>
    %28 = arith.addf %24, %27 : vector<1x1x128xf32>
    %c0_11 = arith.constant 0 : index
    %c0_12 = arith.constant 0 : index
    %c0_13 = arith.constant 0 : index
    %29 = vector.load %arg4[%c0_11, %c0_12, %c0_13] : memref<1x1x128xf32, #tpu.memory_space<vmem>>, vector<1x1x128xf32>
    tpu.vector_store %arg4[%c0_11, %c0_12, %c0_13], %28 {strides = array<i32>} : memref<1x1x128xf32, #tpu.memory_space<vmem>>, vector<1x1x128xf32>,
    %c0_14 = arith.constant 0 : index
    %c0_15 = arith.constant 0 : index
    %c0_16 = arith.constant 0 : index
    %30 = vector.load %arg5[%c0_14, %c0_15, %c0_16] : memref<1x1x128xf32, #tpu.memory_space<vmem>>, vector<1x1x128xf32>
    %cst_17 = arith.constant dense<0.000000e+00> : vector<128xf32>
    %31 = vector.multi_reduction <add>, %23, %cst_17 [0] : vector<16x128xf32> to vector<128xf32>
    %32 = vector.shape_cast %31 : vector<128xf32> to vector<1x128xf32>
    %33 = vector.shape_cast %32 : vector<1x128xf32> to vector<1x1x128xf32>
    %34 = arith.addf %30, %33 : vector<1x1x128xf32>
    %c0_18 = arith.constant 0 : index
    %c0_19 = arith.constant 0 : index
    %c0_20 = arith.constant 0 : index
    %35 = vector.load %arg5[%c0_18, %c0_19, %c0_20] : memref<1x1x128xf32, #tpu.memory_space<vmem>>, vector<1x1x128xf32>
    tpu.vector_store %arg5[%c0_18, %c0_19, %c0_20], %34 {strides = array<i32>} : memref<1x1x128xf32, #tpu.memory_space<vmem>>, vector<1x1x128xf32>,
    return
  }
  func.func @transform_0(%arg0: i32, %arg1: i32) -> (i32, i32) {
    %c1_i32 = arith.constant 1 : i32
    %0 = arith.muli %arg0, %c1_i32 : i32
    %1 = arith.addi %0, %arg1 : i32
    %c0_i32 = arith.constant 0 : i32
    %2 = arith.minsi %1, %c0_i32 : i32
    %c0_i32_0 = arith.constant 0 : i32
    %c0_i32_1 = arith.constant 0 : i32
    return %2, %c0_i32_0 : i32, i32
  }
  func.func @transform_1(%arg0: i32, %arg1: i32) -> (i32, i32) {
    %c1_i32 = arith.constant 1 : i32
    %0 = arith.muli %arg0, %c1_i32 : i32
    %1 = arith.addi %0, %arg1 : i32
    %c0_i32 = arith.constant 0 : i32
    %2 = arith.minsi %1, %c0_i32 : i32
    %c0_i32_0 = arith.constant 0 : i32
    %c0_i32_1 = arith.constant 0 : i32
    return %2, %c0_i32_0 : i32, i32
  }
  func.func @transform_2(%arg0: i32, %arg1: i32) -> (i32, i32, i32) {
    %c0_i32 = arith.constant 0 : i32
    %c0_i32_0 = arith.constant 0 : i32
    %c0_i32_1 = arith.constant 0 : i32
    return %arg0, %c0_i32, %c0_i32_0 : i32, i32, i32
  }
  func.func @transform_3(%arg0: i32, %arg1: i32) -> (i32, i32, i32) {
    %c0_i32 = arith.constant 0 : i32
    %c0_i32_0 = arith.constant 0 : i32
    %c0_i32_1 = arith.constant 0 : i32
    return %arg0, %c0_i32, %c0_i32_0 : i32, i32, i32
  }
}

</mosaic_0001>

<llo_original>
// kernel: tpu_custom_call.1
$region0: #{tpu_custom_call.1}
  #allocation0 [shape = 'u32[]', space=smem, size = 0x4, offset = 0x4, fixed_abs, tag = 'smem constant byte address 0x4 - core index']
  #allocation1 [shape = 'u32[72,128]{1,0:T(1,128)}', space=vmem, size = 0x9000, scoped, tag = 'internal scratch']
  %s0 = inlined_call_operand.hbm [shape: f32[16,128], index: 0, kind: input, shape index: {}]
  %s1 = inlined_call_operand.hbm [shape: f32[16,128], index: 1, kind: input, shape index: {}]
  %s2 = inlined_call_operand.hbm [shape: f32[1,1,128], index: 2, kind: output, shape index: {0}]
  %s3 = inlined_call_operand.hbm [shape: f32[1,1,128], index: 3, kind: output, shape index: {1}]
  %4 = xla_tuple %s2, %s3
  %s5 = sld [smem:[#allocation0]]
  $region38: #{tpu_custom_call.1} parent=0
    _
  %s7 = ssub.s32 1, %s5
  %s8 = scalar_select 0, %s7, %s5
  $region1: #{tpu_custom_call.1} parent=0
    #allocation2 [shape = 'u8[8192]{0}', space=vmem, size = 0x2000, scoped, tag = 'input window, operand 0, single buffered']
    #allocation3 [shape = 's32[1]{0}', space=sflag, size = 0x4, scoped, tag = 'scoped memory for tpu_custom_call.1']
    #allocation4 [shape = 's32[1]{0}', space=sflag, size = 0x4, scoped, tag = 'scoped memory for tpu_custom_call.1']
    #allocation5 [shape = 'u8[8192]{0}', space=vmem, size = 0x2000, scoped, tag = 'input window, operand 1, single buffered']
    #allocation6 [shape = 's32[1]{0}', space=sflag, size = 0x4, scoped, tag = 'scoped memory for tpu_custom_call.1']
    #allocation7 [shape = 'u8[512]{0}', space=vmem, size = 0x400, scoped, tag = 'output window, operand 0, single buffered']
    #allocation8 [shape = 'u8[512]{0}', space=vmem, size = 0x400, scoped, tag = 'output window, operand 1, single buffered']
    #allocation9 [shape = 's32[1]{0}', space=sflag, size = 0x4, scoped, tag = 'scoped memory for tpu_custom_call.1']
    %9 = vsyncpa [#allocation3], 0
    %10 = vsyncpa [#allocation6], 0
    %11 = vsyncpa [#allocation4], 0
    %12 = vsyncpa [#allocation9], 0
    // Predicated region
    $region2: #{tpu_custom_call.1} parent=1 // pred_check
      _
    $region3: #{tpu_custom_call.1} parent=1 // pred_check_branch
      %14 = sbr.rel (0) target = $region5
    $region4: #{tpu_custom_call.1} parent=1 // pred_region
      %s15 = sadd.s32 0, 0
      %p16 = scmp.lt.s32.totalorder %s15, 0
      %s17 = scalar_select %p16, %s15, 0
      %s18 = smul.u32 2, %s17
      %20 = vsyncadd [#allocation3], 0
      %s21 = smul.addr %s18, 8
      %s22 = scalar_lea.hbm %s0, %s21
      %s23 = sshll.u32 %s22, 4
      %s24 = int_to_ptr.hbm [resolvable:$true] %s23
      %s25 = sshll.u32 [#allocation2], 4
      %s26 = int_to_ptr.vmem [resolvable:$true] %s25
      %31 = dma.hbm_to_vmem [thread:$0]  %s24, 256, %s26, [#allocation3], 128, 128, 8
    $region5: #{tpu_custom_call.1} parent=1 // pred_fallthru
      _
    // Predicated region
    $region6: #{tpu_custom_call.1} parent=1 // pred_check
      _
    $region7: #{tpu_custom_call.1} parent=1 // pred_check_branch
      %33 = sbr.rel (0) target = $region9
    $region8: #{tpu_custom_call.1} parent=1 // pred_region
      %s34 = sadd.s32 0, 0
      %p35 = scmp.lt.s32.totalorder %s34, 0
      %s36 = scalar_select %p35, %s34, 0
      %s37 = smul.u32 2, %s36
      %39 = vsyncadd [#allocation6], 0
      %s40 = smul.addr %s37, 8
      %s41 = scalar_lea.hbm %s1, %s40
      %s42 = sshll.u32 %s41, 4
      %s43 = int_to_ptr.hbm [resolvable:$true] %s42
      %s44 = sshll.u32 [#allocation5], 4
      %s45 = int_to_ptr.vmem [resolvable:$true] %s44
      %50 = dma.hbm_to_vmem [thread:$0]  %s43, 256, %s45, [#allocation6], 128, 128, 8
    $region9: #{tpu_custom_call.1} parent=1 // pred_fallthru
      _
    // Predicated region
    $region10: #{tpu_custom_call.1} parent=1 // pred_check
      _
    $region11: #{tpu_custom_call.1} parent=1 // pred_check_branch
      %52 = sbr.rel (0) target = $region13
    $region12: #{tpu_custom_call.1} parent=1 // pred_region
      %54 = dma.done [#allocation3], 256
    $region13: #{tpu_custom_call.1} parent=1 // pred_fallthru
      _
    // Predicated region
    $region14: #{tpu_custom_call.1} parent=1 // pred_check
      _
    $region15: #{tpu_custom_call.1} parent=1 // pred_check_branch
      %56 = sbr.rel (0) target = $region17
    $region16: #{tpu_custom_call.1} parent=1 // pred_region
      %58 = dma.done [#allocation6], 256
    $region17: #{tpu_custom_call.1} parent=1 // pred_fallthru
      _
    %s59 = sadd.s32 0, 0
    %p60 = scmp.lt.s32.totalorder %s59, 0
    %s61 = scalar_select %p60, %s59, 0
    %s62 = smul.u32 2, %s61
    %s63 = sadd.s32 0, 0
    %p64 = scmp.lt.s32.totalorder %s63, 0
    %s65 = scalar_select %p64, %s63, 0
    %s66 = smul.u32 2, %s65
    %p67 = scmp.eq.s32.totalorder 0, 0
    // Predicated region
    $region18: #{tpu_custom_call.1} parent=1 // pred_check
      %p68 = pneg %p67
    $region19: #{tpu_custom_call.1} parent=1 // pred_check_branch
      %70 = sbr.rel (%p68) target = $region21
    $region20: #{tpu_custom_call.1} parent=1 // pred_region
      %71 = vst [vmem:[#allocation7] sm:$0x1] 0.0
      %72 = vst [vmem:[#allocation8] sm:$0x1] 0.0
    $region21: #{tpu_custom_call.1} parent=1 // pred_fallthru
      _
    %v73 = vld [vmem:[#allocation5] sm:$0xff]
    %v74 = vld [vmem:[#allocation5 + $0x8] sm:$0xff]
    %v75 = vld [vmem:[#allocation2] sm:$0xff]
    %v76 = vld [vmem:[#allocation2 + $0x8] sm:$0xff]
    %v77 = vand.u32 2147483647, %v73
    %v78 = vand.u32 2147483647, %v74
    %v79 = vsub.f32 0.0, %v77
    %v80 = vsub.f32 0.0, %v78
    %v81 = vmul.f32 %v79, 1.442695
    %v82 = vpow.pop %v81
    %v83 = vmul.f32 %v80, 1.442695
    %v84 = vpow.pop %v83
    %v85 = vmax.f32 %v73, 0.0
    %v86 = vmax.f32 %v74, 0.0
    %v87 = vmul.f32 %v73, %v75
    %v88 = vmul.f32 %v74, %v76
    %v89 = vsub.f32 %v85, %v87
    %v90 = vsub.f32 %v86, %v88
    %v91 = vadd.f32 %v82, 1.0
    %v92 = vlog2.pop %v91
    %v93 = vmul.f32 %v92, 0.6931472
    %v94 = vmul.f32 -0.5, %v82
    %v95 = vadd.f32 %v94, 1.0
    %v96 = vmul.f32 %v95, %v82
    %v97 = vand.u32 2147483647, %v82
    %vm98 = vcmp.lt.f32.partialorder %v97, 0.0004427343
    %v99 = vsel %vm98, %v96, %v93
    %v100 = vadd.f32 %v84, 1.0
    %v101 = vlog2.pop %v100
    %v102 = vmul.f32 %v101, 0.6931472
    %v103 = vmul.f32 -0.5, %v84
    %v104 = vadd.f32 %v103, 1.0
    %v105 = vmul.f32 %v104, %v84
    %v106 = vand.u32 2147483647, %v84
    %vm107 = vcmp.lt.f32.partialorder %v106, 0.0004427343
    %v108 = vsel %vm107, %v105, %v102
    %v109 = vadd.f32 %v89, %v99
    %v110 = vadd.f32 %v90, %v108
    %v111 = vadd.f32 %v82, 1.0
    %v112 = vadd.f32 %v84, 1.0
    %v113 = vrcp.pop %v111
    %v114 = vrcp.pop %v112
    %vm115 = vcmp.ge.f32.partialorder %v73, 0.0
    %vm116 = vcmp.ge.f32.partialorder %v74, 0.0
    %v117 = vmul.f32 %v82, %v113
    %v118 = vmul.f32 %v84, %v114
    %v119 = vsel %vm115, %v113, %v117
    %v120 = vsel %vm116, %v114, %v118
    %v121 = vsub.f32 %v75, %v119
    %v122 = vsub.f32 %v76, %v120
    %v123 = vand.u32 2147483647, %v121
    %v124 = vand.u32 2147483647, %v122
    %v125 = vld [vmem:[#allocation7] sm:$0x1]
    %v126 = vadd.f32 %v109, %v110
    %v127 = vrot.slane %v126, 4
    %v128 = vadd.f32 %v126, %v127
    %v129 = vrot.slane %v128, 2
    %v130 = vadd.f32 %v128, %v129
    %v131 = vrot.slane %v130, 1
    %v132 = vadd.f32 %v130, %v131
    %v133 = vadd.f32 %v125, %v132
    %134 = vst [vmem:[#allocation7] sm:$0x1] %v133
    %v135 = vld [vmem:[#allocation8] sm:$0x1]
    %v136 = vadd.f32 %v123, %v124
    %v137 = vrot.slane %v136, 4
    %v138 = vadd.f32 %v136, %v137
    %v139 = vrot.slane %v138, 2
    %v140 = vadd.f32 %v138, %v139
    %v141 = vrot.slane %v140, 1
    %v142 = vadd.f32 %v140, %v141
    %v143 = vadd.f32 %v135, %v142
    %144 = vst [vmem:[#allocation8] sm:$0x1] %v143
    // Predicated region
    $region22: #{tpu_custom_call.1} parent=1 // pred_check
      _
    $region23: #{tpu_custom_call.1} parent=1 // pred_check_branch
      %146 = sbr.rel (0) target = $region25
    $region24: #{tpu_custom_call.1} parent=1 // pred_region
      %148 = vsyncadd [#allocation4], 0
      %s150 = sshll.u32 [#allocation7], 4
      %s151 = int_to_ptr.vmem [resolvable:$true] %s150
      %s152 = sshll.u32 %s2, 4
      %s153 = int_to_ptr.hbm [resolvable:$true] %s152
      %155 = dma.vmem_to_hbm [thread:$0]  %s151, 16, %s153, [#allocation4]
    $region25: #{tpu_custom_call.1} parent=1 // pred_fallthru
      _
    // Predicated region
    $region26: #{tpu_custom_call.1} parent=1 // pred_check
      _
    $region27: #{tpu_custom_call.1} parent=1 // pred_check_branch
      %157 = sbr.rel (0) target = $region29
    $region28: #{tpu_custom_call.1} parent=1 // pred_region
      %159 = vsyncadd [#allocation9], 0
      %s161 = sshll.u32 [#allocation8], 4
      %s162 = int_to_ptr.vmem [resolvable:$true] %s161
      %s163 = sshll.u32 %s3, 4
      %s164 = int_to_ptr.hbm [resolvable:$true] %s163
      %166 = dma.vmem_to_hbm [thread:$0]  %s162, 16, %s164, [#allocation9]
    $region29: #{tpu_custom_call.1} parent=1 // pred_fallthru
      _
    // Predicated region
    $region30: #{tpu_custom_call.1} parent=1 // pred_check
      _
    $region31: #{tpu_custom_call.1} parent=1 // pred_check_branch
      %168 = sbr.rel (0) target = $region33
    $region32: #{tpu_custom_call.1} parent=1 // pred_region
      %170 = dma.done [#allocation4], 16
    $region33: #{tpu_custom_call.1} parent=1 // pred_fallthru
      _
    // Predicated region
    $region34: #{tpu_custom_call.1} parent=1 // pred_check
      _
    $region35: #{tpu_custom_call.1} parent=1 // pred_check_branch
      %172 = sbr.rel (0) target = $region37
    $region36: #{tpu_custom_call.1} parent=1 // pred_region
      %174 = dma.done [#allocation9], 16
    $region37: #{tpu_custom_call.1} parent=1 // pred_fallthru
      _
    %175 = vsyncpa [#allocation3], 1
    %176 = vsyncpa [#allocation6], 1
    %177 = vsyncpa [#allocation4], 1
    %178 = vsyncpa [#allocation9], 1

</llo_original>
